<compile_context>
chip_gen: v7x
topology: tpu7x:2x2x1
jax: 0.10.0
libtpu: 0.0.40
codegen_flags: <defaults>
</compile_context>

<pallas_src>
import functools

import jax
import jax.numpy as jnp
from jax import lax
from jax.experimental import pallas as pl
from jax.experimental.pallas import tpu as pltpu

_VMEM_LIMIT_BYTES = 32 * 1024 * 1024


def _logits_t_and_pred(x_ref, w_ref, b_ref, num_labels):
    """Shared epilogue-free part: transposed logits (L, TM) and argmax (1, TM)."""
    x = x_ref[...]                                   # (TM, H) bf16
    w = w_ref[...]                                   # (L,  H) bf16
    b = b_ref[...].astype(jnp.float32)               # (L,  1) f32

    # logits^T = W @ x^T  (MXU, f32 accumulation) -> (L, TM), lane-major rows.
    logits_t = lax.dot_general(
        w, x, (((1,), (1,)), ((), ())),
        preferred_element_type=jnp.float32) + b

    lab_iota = lax.broadcasted_iota(jnp.int32, logits_t.shape, 0)   # (L, TM)
    col_max = jnp.max(logits_t, axis=0, keepdims=True)              # (1, TM)
    # first-max index (min index among ties), matching torch.argmax
    pred = jnp.min(jnp.where(logits_t == col_max, lab_iota, num_labels),
                   axis=0, keepdims=True).astype(jnp.int32)         # (1, TM)
    return logits_t, lab_iota, col_max, pred


def _decode_kernel(num_labels, x_ref, w_ref, b_ref, pred_ref):
    _, _, _, pred = _logits_t_and_pred(x_ref, w_ref, b_ref, num_labels)
    pred_ref[...] = pred.reshape(1, 1, pred.shape[-1])


def _loss_kernel(n_rows, row_tile, num_labels,
                 x_ref, w_ref, b_ref, labels_ref, pred_ref, loss_ref):
    logits_t, lab_iota, col_max, pred = _logits_t_and_pred(
        x_ref, w_ref, b_ref, num_labels)
    pred_ref[...] = pred.reshape(1, 1, row_tile)

    labels = labels_ref[...].reshape(1, row_tile)                    # (1, TM) int32

    # stable logsumexp along the label (sublane) axis
    shifted = logits_t - col_max                                     # (L, TM)
    lse = jnp.log(jnp.sum(jnp.exp(shifted), axis=0, keepdims=True)) + col_max
    onehot = (lab_iota == labels).astype(jnp.float32)                # (L, TM)
    label_logit = jnp.sum(logits_t * onehot, axis=0, keepdims=True)  # (1, TM)
    per_row = lse - label_logit                                      # (1, TM)

    # zero padded rows so the wrapper can divide by the true row count
    row_id = (pl.program_id(0) * row_tile
              + lax.broadcasted_iota(jnp.int32, per_row.shape, 1))
    per_row = jnp.where(row_id < n_rows, per_row, 0.0)

    # in-kernel partial reduction to a single lane-dense 128-wide row per tile
    acc = per_row[:, 0:128]
    for c in range(1, row_tile // 128):
        acc = acc + per_row[:, c * 128:(c + 1) * 128]
    loss_ref[...] = acc.reshape(1, 1, 128)


def _choose_row_tile(n_rows, hidden):
    # Lane-dense outputs require a multiple of 128. Cap the bf16 x tile at
    # ~4 MiB so the double-buffered pipeline fits comfortably on v5e/v6e/v7x.
    cap_rows = max(128, ((4 * 1024 * 1024) // max(1, 2 * hidden)) // 128 * 128)
    tile = min(512, cap_rows)
    rounded = ((n_rows + 127) // 128) * 128      # don't pad tiny inputs up to 512
    return max(128, min(tile, rounded))


@functools.partial(jax.jit, static_argnames=("row_tile",))
def _linear_classifier_decode_pallas(x2d, weight, bias, row_tile):
    n_rows, hidden = x2d.shape
    num_labels = weight.shape[0]
    n_tiles = pl.cdiv(n_rows, row_tile)
    n_pad = n_tiles * row_tile

    x_bf = x2d.astype(jnp.bfloat16)
    w_bf = weight.astype(jnp.bfloat16)
    b2d = bias.astype(jnp.float32).reshape(num_labels, 1)
    if n_pad != n_rows:
        x_bf = jnp.pad(x_bf, ((0, n_pad - n_rows), (0, 0)))

    pred3d = pl.pallas_call(
        functools.partial(_decode_kernel, num_labels),
        out_shape=jax.ShapeDtypeStruct((n_tiles, 1, row_tile), jnp.int32),
        grid_spec=pltpu.PrefetchScalarGridSpec(
            num_scalar_prefetch=0,
            grid=(n_tiles,),
            in_specs=[
                pl.BlockSpec((row_tile, hidden), lambda i: (i, 0)),
                pl.BlockSpec((num_labels, hidden), lambda i: (0, 0)),
                pl.BlockSpec((num_labels, 1), lambda i: (0, 0)),
            ],
            out_specs=pl.BlockSpec((1, 1, row_tile), lambda i: (i, 0, 0)),
        ),
        compiler_params=pltpu.CompilerParams(
            dimension_semantics=("parallel",),
            vmem_limit_bytes=_VMEM_LIMIT_BYTES,
        ),
    )(x_bf, w_bf, b2d)
    return pred3d.reshape(n_pad)[:n_rows]


@functools.partial(jax.jit, static_argnames=("row_tile",))
def _linear_classifier_loss_pallas(x2d, weight, bias, labels_flat, row_tile):
    n_rows, hidden = x2d.shape
    num_labels = weight.shape[0]
    n_tiles = pl.cdiv(n_rows, row_tile)
    n_pad = n_tiles * row_tile

    x_bf = x2d.astype(jnp.bfloat16)
    w_bf = weight.astype(jnp.bfloat16)
    b2d = bias.astype(jnp.float32).reshape(num_labels, 1)
    labels_flat = labels_flat.astype(jnp.int32)
    if n_pad != n_rows:
        x_bf = jnp.pad(x_bf, ((0, n_pad - n_rows), (0, 0)))
        labels_flat = jnp.pad(labels_flat, (0, n_pad - n_rows))
    labels3d = labels_flat.reshape(n_tiles, 1, row_tile)

    pred3d, loss3d = pl.pallas_call(
        functools.partial(_loss_kernel, n_rows, row_tile, num_labels),
        out_shape=(
            jax.ShapeDtypeStruct((n_tiles, 1, row_tile), jnp.int32),
            jax.ShapeDtypeStruct((n_tiles, 1, 128), jnp.float32),
        ),
        grid_spec=pltpu.PrefetchScalarGridSpec(
            num_scalar_prefetch=0,
            grid=(n_tiles,),
            in_specs=[
                pl.BlockSpec((row_tile, hidden), lambda i: (i, 0)),
                pl.BlockSpec((num_labels, hidden), lambda i: (0, 0)),
                pl.BlockSpec((num_labels, 1), lambda i: (0, 0)),
                pl.BlockSpec((1, 1, row_tile), lambda i: (i, 0, 0)),
            ],
            out_specs=[
                pl.BlockSpec((1, 1, row_tile), lambda i: (i, 0, 0)),
                pl.BlockSpec((1, 1, 128), lambda i: (i, 0, 0)),
            ],
        ),
        compiler_params=pltpu.CompilerParams(
            dimension_semantics=("parallel",),
            vmem_limit_bytes=_VMEM_LIMIT_BYTES,
        ),
    )(x_bf, w_bf, b2d, labels3d)

    pred_flat = pred3d.reshape(n_pad)[:n_rows]
    loss = jnp.sum(loss3d) / n_rows            # CrossEntropyLoss default 'mean'
    return loss, pred_flat


def linear_classifier_forward(hidden_states, weight, bias, labels=None,
                              no_decode=False, row_tile=None):
    """Mirrors LinearClassifier.forward -> (loss, pred_labels)."""
    batch, seq, hidden = hidden_states.shape
    x2d = hidden_states.reshape(-1, hidden)
    n_rows = x2d.shape[0]
    if row_tile is None:
        row_tile = _choose_row_tile(n_rows, hidden)
    assert row_tile % 128 == 0

    if labels is None:
        pred_flat = _linear_classifier_decode_pallas(
            x2d, weight, bias, row_tile=row_tile)
        return None, pred_flat.reshape(batch, seq)

    loss, pred_flat = _linear_classifier_loss_pallas(
        x2d, weight, bias, labels.reshape(-1), row_tile=row_tile)
    pred_labels = None if no_decode else pred_flat.reshape(batch, seq)
    return loss, pred_labels


if __name__ == "__main__":
    batch, seq, hidden, num_labels = 2, 8, 32, 9

    key = jax.random.PRNGKey(0)
    k_x, k_w, k_b, k_lbl = jax.random.split(key, 4)

    hidden_states = jax.random.normal(k_x, (batch, seq, hidden), jnp.float32)
    bound = 1.0 / (hidden ** 0.5)
    weight = jax.random.uniform(k_w, (num_labels, hidden), jnp.float32, -bound, bound)
    bias = jax.random.uniform(k_b, (num_labels,), jnp.float32, -bound, bound)
    labels = jax.random.randint(k_lbl, (batch, seq), 0, num_labels, jnp.int32)

    # with labels: loss + decoded labels
    loss, preds = linear_classifier_forward(hidden_states, weight, bias, labels)
    loss, preds = jax.block_until_ready((loss, preds))

    # with labels, no_decode: loss only
    loss_nd, preds_nd = linear_classifier_forward(
        hidden_states, weight, bias, labels, no_decode=True)
    loss_nd = jax.block_until_ready(loss_nd)
    assert preds_nd is None

    # without labels: decode only
    _, preds_only = linear_classifier_forward(hidden_states, weight, bias, None)
    preds_only = jax.block_until_ready(preds_only)

    # pure-JAX reference with matching bf16-in / f32-accumulate numerics
    x_bf = hidden_states.reshape(-1, hidden).astype(jnp.bfloat16)
    w_bf = weight.astype(jnp.bfloat16)
    logits_ref = jnp.dot(x_bf, w_bf.T, preferred_element_type=jnp.float32) + bias
    pred_ref = jnp.argmax(logits_ref, axis=-1).reshape(batch, seq)
    lse = jax.nn.logsumexp(logits_ref, axis=-1)
    loss_ref = jnp.mean(lse - logits_ref[jnp.arange(batch * seq), labels.reshape(-1)])

    assert jnp.all(preds == pred_ref), "argmax mismatch"
    assert jnp.all(preds_only == pred_ref), "argmax mismatch (no labels)"
    assert jnp.allclose(loss, loss_ref, rtol=1e-4, atol=1e-4), "loss mismatch"
    assert jnp.allclose(loss_nd, loss_ref, rtol=1e-4, atol=1e-4), "loss mismatch (no_decode)"

    print("KERNEL_OK")
</pallas_src>

<mosaic_0001>
module attributes {stable_mosaic.version = 11 : i64} {
  func.func @_loss_kernel(%arg0: i32, %arg1: memref<128x32xbf16, #tpu.memory_space<vmem>>, %arg2: memref<9x32xbf16, #tpu.memory_space<vmem>>, %arg3: memref<9x1xf32, #tpu.memory_space<vmem>>, %arg4: memref<1x1x128xi32, #tpu.memory_space<vmem>>, %arg5: memref<1x1x128xi32, #tpu.memory_space<vmem>>, %arg6: memref<1x1x128xf32, #tpu.memory_space<vmem>>) attributes {dimension_semantics = [#tpu.dimension_semantics<parallel>], iteration_bounds = array<i64: 1>, scalar_prefetch = 0 : i64, scratch_operands = 0 : i64, tpu.core_type = #tpu.core_type<tc>, window_params = [{transform_indices = @transform_0, window_bounds = array<i64: 128, 32>}, {pipeline_mode = #tpu.pipeline_mode<synchronous>, transform_indices = @transform_1, window_bounds = array<i64: 9, 32>}, {pipeline_mode = #tpu.pipeline_mode<synchronous>, transform_indices = @transform_2, window_bounds = array<i64: 9, 1>}, {transform_indices = @transform_3, window_bounds = array<i64: 1, 1, 128>}, {transform_indices = @transform_4, window_bounds = array<i64: 1, 1, 128>}, {transform_indices = @transform_5, window_bounds = array<i64: 1, 1, 128>}]} {
    %c0 = arith.constant 0 : index
    %c0_0 = arith.constant 0 : index
    %0 = vector.load %arg1[%c0, %c0_0] : memref<128x32xbf16, #tpu.memory_space<vmem>>, vector<128x32xbf16>
    %c0_1 = arith.constant 0 : index
    %c0_2 = arith.constant 0 : index
    %1 = vector.load %arg2[%c0_1, %c0_2] : memref<9x32xbf16, #tpu.memory_space<vmem>>, vector<9x32xbf16>
    %c0_3 = arith.constant 0 : index
    %c0_4 = arith.constant 0 : index
    %2 = vector.load %arg3[%c0_3, %c0_4] : memref<9x1xf32, #tpu.memory_space<vmem>>, vector<9x1xf32>
    %cst = arith.constant dense<0.000000e+00> : vector<9x128xf32>
    %3 = tpu.matmul %1, %0, %cst {dimension_numbers = #tpu.dot_dimension_numbers<[1], [1], [0], [0], [0, 0, 1, 0], [], []>} : vector<9x32xbf16>, vector<128x32xbf16>, vector<9x128xf32> -> vector<9x128xf32>
    %4 = vector.broadcast %2 : vector<9x1xf32> to vector<9x128xf32>
    %5 = arith.addf %3, %4 : vector<9x128xf32>
    %6 = tpu.iota {dimensions = array<i32: 0>} : vector<9x128xi32>
    %cst_5 = arith.constant dense<0xFF800000> : vector<128xf32>
    %7 = vector.multi_reduction <maximumf>, %5, %cst_5 [0] : vector<9x128xf32> to vector<128xf32>
    %8 = vector.shape_cast %7 : vector<128xf32> to vector<1x128xf32>
    %9 = vector.broadcast %8 : vector<1x128xf32> to vector<9x128xf32>
    %10 = arith.cmpf oeq, %5, %9 : vector<9x128xf32>
    %c9_i32 = arith.constant 9 : i32
    %11 = vector.broadcast %c9_i32 : i32 to vector<9x128xi32>
    %12 = arith.select %10, %6, %11 : vector<9x128xi1>, vector<9x128xi32>
    %cst_6 = arith.constant dense<2147483647> : vector<128xi32>
    %13 = vector.multi_reduction <minsi>, %12, %cst_6 [0] : vector<9x128xi32> to vector<128xi32>
    %14 = vector.shape_cast %13 : vector<128xi32> to vector<1x128xi32>
    %15 = vector.shape_cast %14 : vector<1x128xi32> to vector<1x1x128xi32>
    %c0_7 = arith.constant 0 : index
    %c0_8 = arith.constant 0 : index
    %c0_9 = arith.constant 0 : index
    %16 = vector.load %arg5[%c0_7, %c0_8, %c0_9] : memref<1x1x128xi32, #tpu.memory_space<vmem>>, vector<1x1x128xi32>
    tpu.vector_store %arg5[%c0_7, %c0_8, %c0_9], %15 {strides = array<i32>} : memref<1x1x128xi32, #tpu.memory_space<vmem>>, vector<1x1x128xi32>,
    %c0_10 = arith.constant 0 : index
    %c0_11 = arith.constant 0 : index
    %c0_12 = arith.constant 0 : index
    %17 = vector.load %arg4[%c0_10, %c0_11, %c0_12] : memref<1x1x128xi32, #tpu.memory_space<vmem>>, vector<1x1x128xi32>
    %18 = vector.shape_cast %17 : vector<1x1x128xi32> to vector<1x128xi32>
    %19 = vector.broadcast %8 : vector<1x128xf32> to vector<9x128xf32>
    %20 = arith.subf %5, %19 : vector<9x128xf32>
    %21 = math.exp %20 : vector<9x128xf32>
    %cst_13 = arith.constant dense<0.000000e+00> : vector<128xf32>
    %22 = vector.multi_reduction <add>, %21, %cst_13 [0] : vector<9x128xf32> to vector<128xf32>
    %23 = vector.shape_cast %22 : vector<128xf32> to vector<1x128xf32>
    %24 = math.log %23 : vector<1x128xf32>
    %25 = arith.addf %24, %8 : vector<1x128xf32>
    %26 = vector.broadcast %18 : vector<1x128xi32> to vector<9x128xi32>
    %27 = arith.cmpi eq, %6, %26 : vector<9x128xi32>
    %28 = arith.extui %27 : vector<9x128xi1> to vector<9x128xi32>
    %29 = arith.sitofp %28 : vector<9x128xi32> to vector<9x128xf32>
    %30 = arith.mulf %5, %29 : vector<9x128xf32>
    %cst_14 = arith.constant dense<0.000000e+00> : vector<128xf32>
    %31 = vector.multi_reduction <add>, %30, %cst_14 [0] : vector<9x128xf32> to vector<128xf32>
    %32 = vector.shape_cast %31 : vector<128xf32> to vector<1x128xf32>
    %33 = arith.subf %25, %32 : vector<1x128xf32>
    %c128_i32 = arith.constant 128 : i32
    %34 = arith.muli %arg0, %c128_i32 : i32
    %35 = tpu.iota {dimensions = array<i32: 1>} : vector<1x128xi32>
    %36 = vector.broadcast %34 : i32 to vector<1x128xi32>
    %37 = arith.addi %36, %35 : vector<1x128xi32>
    %c16_i32 = arith.constant 16 : i32
    %38 = vector.broadcast %c16_i32 : i32 to vector<1x128xi32>
    %39 = arith.cmpi slt, %37, %38 : vector<1x128xi32>
    %cst_15 = arith.constant 0.000000e+00 : f32
    %40 = vector.broadcast %cst_15 : f32 to vector<1x128xf32>
    %41 = arith.select %39, %33, %40 : vector<1x128xi1>, vector<1x128xf32>
    %42 = vector.shape_cast %41 : vector<1x128xf32> to vector<1x1x128xf32>
    %c0_16 = arith.constant 0 : index
    %c0_17 = arith.constant 0 : index
    %c0_18 = arith.constant 0 : index
    %43 = vector.load %arg6[%c0_16, %c0_17, %c0_18] : memref<1x1x128xf32, #tpu.memory_space<vmem>>, vector<1x1x128xf32>
    tpu.vector_store %arg6[%c0_16, %c0_17, %c0_18], %42 {strides = array<i32>} : memref<1x1x128xf32, #tpu.memory_space<vmem>>, vector<1x1x128xf32>,
    return
  }
  func.func @transform_0(%arg0: i32) -> (i32, i32) {
    %c0_i32 = arith.constant 0 : i32
    %c0_i32_0 = arith.constant 0 : i32
    return %arg0, %c0_i32 : i32, i32
  }
  func.func @transform_1(%arg0: i32) -> (i32, i32) {
    %c0_i32 = arith.constant 0 : i32
    %c0_i32_0 = arith.constant 0 : i32
    %c0_i32_1 = arith.constant 0 : i32
    return %c0_i32, %c0_i32_0 : i32, i32
  }
  func.func @transform_2(%arg0: i32) -> (i32, i32) {
    %c0_i32 = arith.constant 0 : i32
    %c0_i32_0 = arith.constant 0 : i32
    %c0_i32_1 = arith.constant 0 : i32
    return %c0_i32, %c0_i32_0 : i32, i32
  }
  func.func @transform_3(%arg0: i32) -> (i32, i32, i32) {
    %c0_i32 = arith.constant 0 : i32
    %c0_i32_0 = arith.constant 0 : i32
    %c0_i32_1 = arith.constant 0 : i32
    return %arg0, %c0_i32, %c0_i32_0 : i32, i32, i32
  }
  func.func @transform_4(%arg0: i32) -> (i32, i32, i32) {
    %c0_i32 = arith.constant 0 : i32
    %c0_i32_0 = arith.constant 0 : i32
    %c0_i32_1 = arith.constant 0 : i32
    return %arg0, %c0_i32, %c0_i32_0 : i32, i32, i32
  }
  func.func @transform_5(%arg0: i32) -> (i32, i32, i32) {
    %c0_i32 = arith.constant 0 : i32
    %c0_i32_0 = arith.constant 0 : i32
    %c0_i32_1 = arith.constant 0 : i32
    return %arg0, %c0_i32, %c0_i32_0 : i32, i32, i32
  }
}

</mosaic_0001>

<llo_original>
// kernel: _linear_classifier_loss_pallas.1
$region0: #{_linear_classifier_loss_pallas.1}
  #allocation0 [shape = 'u32[]', space=smem, size = 0x4, offset = 0x4, fixed_abs, tag = 'smem constant byte address 0x4 - core index']
  #allocation1 [shape = 'u32[144,128]{1,0:T(1,128)}', space=vmem, size = 0x12000, scoped, tag = 'internal scratch']
  %s0 = inlined_call_operand.vmem [shape: bf16[128,32], index: 0, kind: input, shape index: {}]
  %s1 = inlined_call_operand.vmem [shape: bf16[9,32], index: 1, kind: input, shape index: {}]
  %s2 = inlined_call_operand.vmem [shape: f32[9,1], index: 2, kind: input, shape index: {}]
  %s3 = inlined_call_operand.vmem [shape: s32[1,1,128], index: 3, kind: input, shape index: {}]
  %s4 = inlined_call_operand.vmem [shape: s32[1,1,128], index: 4, kind: output, shape index: {0}]
  %s5 = inlined_call_operand.vmem [shape: f32[1,1,128], index: 5, kind: output, shape index: {1}]
  %6 = xla_tuple %s4, %s5
  %s7 = sld [smem:[#allocation0]]
  $region34: #{_linear_classifier_loss_pallas.1} parent=0
    _
  %s9 = ssub.s32 1, %s7
  %s10 = scalar_select 0, %s9, %s7
  // Predicated region
  $region2: #{_linear_classifier_loss_pallas.1} parent=0 // pred_check
    _
  $region3: #{_linear_classifier_loss_pallas.1} parent=0 // pred_check_branch
    %12 = sbr.rel (0) target = $region5
  $region4: #{_linear_classifier_loss_pallas.1} parent=0 // pred_region
    _
  $region5: #{_linear_classifier_loss_pallas.1} parent=0 // pred_fallthru
    _
  // Predicated region
  $region6: #{_linear_classifier_loss_pallas.1} parent=0 // pred_check
    _
  $region7: #{_linear_classifier_loss_pallas.1} parent=0 // pred_check_branch
    %14 = sbr.rel (0) target = $region9
  $region8: #{_linear_classifier_loss_pallas.1} parent=0 // pred_region
    _
  $region9: #{_linear_classifier_loss_pallas.1} parent=0 // pred_fallthru
    _
  // Predicated region
  $region10: #{_linear_classifier_loss_pallas.1} parent=0 // pred_check
    _
  $region11: #{_linear_classifier_loss_pallas.1} parent=0 // pred_check_branch
    %16 = sbr.rel (0) target = $region13
  $region12: #{_linear_classifier_loss_pallas.1} parent=0 // pred_region
    _
  $region13: #{_linear_classifier_loss_pallas.1} parent=0 // pred_fallthru
    _
  // Predicated region
  $region14: #{_linear_classifier_loss_pallas.1} parent=0 // pred_check
    _
  $region15: #{_linear_classifier_loss_pallas.1} parent=0 // pred_check_branch
    %18 = sbr.rel (0) target = $region17
  $region16: #{_linear_classifier_loss_pallas.1} parent=0 // pred_region
    _
  $region17: #{_linear_classifier_loss_pallas.1} parent=0 // pred_fallthru
    _
  %v20 = vld [vmem:[%s0] sm:$0xf]
  %v21 = vld [vmem:[%s0 + $0x4] sm:$0xf]
  %v22 = vld [vmem:[%s0 + $0x8] sm:$0xf]
  %v23 = vld [vmem:[%s0 + $0xc] sm:$0xf]
  %v24 = vld [vmem:[%s0 + $0x10] sm:$0xf]
  %v25 = vld [vmem:[%s0 + $0x14] sm:$0xf]
  %v26 = vld [vmem:[%s0 + $0x18] sm:$0xf]
  %v27 = vld [vmem:[%s0 + $0x1c] sm:$0xf]
  %v28 = vld [vmem:[%s0 + $0x20] sm:$0xf]
  %v29 = vld [vmem:[%s0 + $0x24] sm:$0xf]
  %v30 = vld [vmem:[%s0 + $0x28] sm:$0xf]
  %v31 = vld [vmem:[%s0 + $0x2c] sm:$0xf]
  %v32 = vld [vmem:[%s0 + $0x30] sm:$0xf]
  %v33 = vld [vmem:[%s0 + $0x34] sm:$0xf]
  %v34 = vld [vmem:[%s0 + $0x38] sm:$0xf]
  %v35 = vld [vmem:[%s0 + $0x3c] sm:$0xf]
  %v36 = vld [vmem:[%s1] sm:$0xf]
  %v37 = vld [vmem:[%s1 + $0x4] sm:$0x1]
  %v38 = vld [vmem:[%s2] sm:$0xff]
  %v39 = vld [vmem:[%s2 + $0x8] sm:$0x1]
  %41 = vset.pattern.permute.xlu0 0
  %42 = vperm.xlu0 %41, %v38
  %v43 = vpop.permute.xlu0 %42
  %46 = vset.pattern.permute.xlu0 0
  %47 = vperm.xlu0 %46, %v39
  %v48 = vpop.permute.xlu0 %47
  %v52 = vunpack.c.l.b16 %v36
  %v53 = vunpack.c.l.b16 %v37
  %v54 = vpack.c.b16 %v53, %v52
  %v71 = vunpack.c.l.b16 %v20
  %v72 = vunpack.c.l.b16 %v21
  %v73 = vunpack.c.l.b16 %v22
  %v74 = vunpack.c.l.b16 %v23
  %v75 = vunpack.c.l.b16 %v24
  %v76 = vunpack.c.l.b16 %v25
  %v77 = vunpack.c.l.b16 %v26
  %v78 = vunpack.c.l.b16 %v27
  %v79 = vunpack.c.l.b16 %v28
  %v80 = vunpack.c.l.b16 %v29
  %v81 = vunpack.c.l.b16 %v30
  %v82 = vunpack.c.l.b16 %v31
  %v83 = vunpack.c.l.b16 %v32
  %v84 = vunpack.c.l.b16 %v33
  %v85 = vunpack.c.l.b16 %v34
  %v86 = vunpack.c.l.b16 %v35
  %v87 = vpack.c.b16 %v72, %v71
  %v88 = vpack.c.b16 %v74, %v73
  %v89 = vpack.c.b16 %v76, %v75
  %v90 = vpack.c.b16 %v78, %v77
  %v91 = vpack.c.b16 %v80, %v79
  %v92 = vpack.c.b16 %v82, %v81
  %v93 = vpack.c.b16 %v84, %v83
  %v94 = vpack.c.b16 %v86, %v85
  %vm95 = vcmask 261120
  %v97 = vsel %vm95, %v54, 0
  %v100 = vsel %vm95, %v87, 0
  %v103 = vsel %vm95, %v88, 0
  %v106 = vsel %vm95, %v89, 0
  %v109 = vsel %vm95, %v90, 0
  %v112 = vsel %vm95, %v91, 0
  %v115 = vsel %vm95, %v92, 0
  %v118 = vsel %vm95, %v93, 0
  %v121 = vsel %vm95, %v94, 0
  %123 = vmatprep.subr.bf16.mxu0 0
  %124 = vmatpush1.bf16.xpose.msra.mxu0 %v100
  %125 = vmatprep.subr.bf16.mxu0 0
  %126 = vmatpush1.bf16.xpose.msra.mxu0 %v103
  %127 = vmatprep.subr.bf16.mxu0 0
  %128 = vmatpush1.bf16.xpose.msra.mxu0 %v106
  %129 = vmatprep.subr.bf16.mxu0 0
  %130 = vmatpush1.bf16.xpose.msra.mxu0 %v109
  %131 = vmatprep.subr.bf16.mxu0 0
  %132 = vmatpush1.bf16.xpose.msra.mxu0 %v112
  %133 = vmatprep.subr.bf16.mxu0 0
  %134 = vmatpush1.bf16.xpose.msra.mxu0 %v115
  %135 = vmatprep.subr.bf16.mxu0 0
  %136 = vmatpush1.bf16.xpose.msra.mxu0 %v118
  %137 = vmatprep.subr.bf16.mxu0 0
  %138 = vmatpush1.bf16.xpose.msra.mxu0 %v121
  %139 = vmatprep.subr.bf16.mxu0 0
  %140 = vmatpush1.bf16.xpose.msra.mxu0 0
  %141 = vmatprep.subr.bf16.mxu0 0
  %142 = vmatpush1.bf16.xpose.msra.mxu0 0
  %143 = vmatprep.subr.bf16.mxu0 0
  %144 = vmatpush1.bf16.xpose.msra.mxu0 0
  %145 = vmatprep.subr.bf16.mxu0 0
  %146 = vmatpush1.bf16.xpose.msra.mxu0 0
  %147 = vmatprep.subr.bf16.mxu0 0
  %148 = vmatpush1.bf16.xpose.msra.mxu0 0
  %149 = vmatprep.subr.bf16.mxu0 0
  %150 = vmatpush1.bf16.xpose.msra.mxu0 0
  %151 = vmatprep.subr.bf16.mxu0 0
  %152 = vmatpush1.bf16.xpose.msra.mxu0 0
  %153 = vmatprep.subr.bf16.mxu0 0
  %154 = vmatpush1.bf16.xpose.msra.mxu0 0
  %155 = vmatprep.mubr.bf16.mxu0 0
  %156 = vmatmul.mubr.bf16.gmra.mrb[0].mxu0 %v97
  %v157 = vpop.f32.mrb[0].mxu0
  %v158 = vadd.f32 %v43, %v157
  %v159 = vpop.f32.mrb[0].mxu0
  %v160 = vpop.f32.mrb[0].mxu0
  %v161 = vadd.f32 %v48, %v160
  %v162 = vpop.f32.mrb[0].mxu0
  %163 = vdwg.mxu0
  %v164 = vlaneseq
  %v165 = vshrl.u32 %v164, 7
  %v166 = vadd.s32 %v165, 8
  %vm167 = vcmask 1040384
  %v168 = vsel %vm167, %v161, -inf
  %v169 = vmax.f32 %v158, %v168
  %v170 = vrot.slane %v169, 4
  %v171 = vmax.f32 %v169, %v170
  %v172 = vrot.slane %v171, 2
  %v173 = vmax.f32 %v171, %v172
  %v174 = vrot.slane %v173, 1
  %v175 = vmax.f32 %v173, %v174
  %vm176 = vcmp.eq.f32.partialorder %v158, %v175
  %vm177 = vcmp.eq.f32.partialorder %v161, %v175
  %v178 = vsel %vm176, %v165, 9
  %v179 = vsel %vm177, %v166, 9
  %v180 = vsel %vm167, %v179, 2147483647
  %vm181 = vcmp.lt.s32.totalorder %v178, %v180
  %v182 = vsel %vm181, %v178, %v180
  %v183 = vrot.slane %v182, 4
  %vm184 = vcmp.lt.s32.totalorder %v182, %v183
  %v185 = vsel %vm184, %v182, %v183
  %v186 = vrot.slane %v185, 2
  %vm187 = vcmp.lt.s32.totalorder %v185, %v186
  %v188 = vsel %vm187, %v185, %v186
  %v189 = vrot.slane %v188, 1
  %vm190 = vcmp.lt.s32.totalorder %v188, %v189
  %v191 = vsel %vm190, %v188, %v189
  %192 = vst [vmem:[%s4] sm:$0x1] %v191
  %v193 = vld [vmem:[%s3] sm:$0x1]
  %v194 = vsub.f32 %v158, %v175
  %v195 = vsub.f32 %v161, %v175
  %v196 = vmul.f32 %v194, 1.442695
  %v197 = vpow.pop %v196
  %v198 = vmul.f32 %v195, 1.442695
  %v199 = vpow.pop %v198
  %v200 = vsel %vm167, %v199, 0.0
  %v201 = vadd.f32 %v197, %v200
  %v202 = vrot.slane %v201, 4
  %v203 = vadd.f32 %v201, %v202
  %v204 = vrot.slane %v203, 2
  %v205 = vadd.f32 %v203, %v204
  %v206 = vrot.slane %v205, 1
  %v207 = vadd.f32 %v205, %v206
  %v208 = vlog2.pop %v207
  %v209 = vmul.f32 %v208, 0.6931472
  %v210 = vadd.f32 %v209, %v175
  %v211 = vlaneseq
  %v212 = vshrl.u32 %v211, 7
  %v213 = vsub.s32 0, %v212
  %v214 = vrot.slane %v193, %v213
  %vm215 = vcmp.eq.s32.totalorder %v165, %v214
  %vm216 = vcmp.eq.s32.totalorder %v166, %v214
  %v217 = vsel %vm215, 1, 0
  %v218 = vsel %vm216, 1, 0
  %v219 = vcvt.s32.f32 %v217
  %v220 = vcvt.s32.f32 %v218
  %v221 = vmul.f32 %v158, %v219
  %v222 = vmul.f32 %v161, %v220
  %v223 = vsel %vm167, %v222, 0.0
  %v224 = vadd.f32 %v221, %v223
  %v225 = vrot.slane %v224, 4
  %v226 = vadd.f32 %v224, %v225
  %v227 = vrot.slane %v226, 2
  %v228 = vadd.f32 %v226, %v227
  %v229 = vrot.slane %v228, 1
  %v230 = vadd.f32 %v228, %v229
  %v231 = vsub.f32 %v210, %v230
  %s232 = smul.u32 0, 128
  %v233 = vlaneseq
  %v234 = vand.u32 %v233, 127
  %v235 = vstv %s232
  %v236 = vadd.s32 %v235, %v234
  %vm237 = vcmp.lt.s32.totalorder %v236, 16
  %v238 = vsel %vm237, %v231, 0.0
  %239 = vst [vmem:[%s5] sm:$0x1] %v238
  // Predicated region
  $region18: #{_linear_classifier_loss_pallas.1} parent=0 // pred_check
    _
  $region19: #{_linear_classifier_loss_pallas.1} parent=0 // pred_check_branch
    %241 = sbr.rel (0) target = $region21
  $region20: #{_linear_classifier_loss_pallas.1} parent=0 // pred_region
    _
  $region21: #{_linear_classifier_loss_pallas.1} parent=0 // pred_fallthru
    _
  // Predicated region
  $region22: #{_linear_classifier_loss_pallas.1} parent=0 // pred_check
    _
  $region23: #{_linear_classifier_loss_pallas.1} parent=0 // pred_check_branch
    %243 = sbr.rel (0) target = $region25
  $region24: #{_linear_classifier_loss_pallas.1} parent=0 // pred_region
    _
  $region25: #{_linear_classifier_loss_pallas.1} parent=0 // pred_fallthru
    _
  // Predicated region
  $region26: #{_linear_classifier_loss_pallas.1} parent=0 // pred_check
    _
  $region27: #{_linear_classifier_loss_pallas.1} parent=0 // pred_check_branch
    %245 = sbr.rel (0) target = $region29
  $region28: #{_linear_classifier_loss_pallas.1} parent=0 // pred_region
    _
  $region29: #{_linear_classifier_loss_pallas.1} parent=0 // pred_fallthru
    _
  // Predicated region
  $region30: #{_linear_classifier_loss_pallas.1} parent=0 // pred_check
    _
  $region31: #{_linear_classifier_loss_pallas.1} parent=0 // pred_check_branch
    %247 = sbr.rel (0) target = $region33
  $region32: #{_linear_classifier_loss_pallas.1} parent=0 // pred_region
    _
  $region33: #{_linear_classifier_loss_pallas.1} parent=0 // pred_fallthru
    _

</llo_original>
